<compile_context>
chip_gen: v6e
topology: v6e:2x2x1
jax: 0.10.0
libtpu: 0.0.40
codegen_flags: <defaults>
</compile_context>

<pallas_src>
import jax
import jax.numpy as jnp
from jax.experimental import pallas as pl
from jax.experimental.pallas import tpu as pltpu


def _round_up(x: int, m: int) -> int:
    return ((x + m - 1) // m) * m


def _cdiv(a: int, b: int) -> int:
    return -(-a // b)


def _edm_loss_kernel(ones_ref, tri_ref, pt_ref, pe_ref, out_ref, acc_ref):
    """Processes one (TILE, GK) packed tile per grid step; grid = (splits, steps)."""
    j = pl.program_id(1)

    @pl.when(j == 0)
    def _init():
        acc_ref[...] = jnp.zeros_like(acc_ref)

    # Cast in-kernel so narrower (e.g. bf16) inputs ship over the DMA at fewer
    # bytes; all arithmetic stays f32.
    pt = pt_ref[...].astype(jnp.float32)     # (TILE, GK) packed target rows
    pe = pe_ref[...].astype(jnp.float32)     # (TILE, GK) packed estimate rows

    def mxu(lhs_f32, rhs_bf16):
        # f32 x {0,1} matmul as hi/lo bf16 passes (RHS exact in bf16, f32
        # accumulation), giving ~f32-accurate results on the MXU.
        hi = lhs_f32.astype(jnp.bfloat16)
        lo = (lhs_f32 - hi.astype(jnp.float32)).astype(jnp.bfloat16)
        return (jnp.dot(hi, rhs_bf16, preferred_element_type=jnp.float32)
                + jnp.dot(lo, rhs_bf16, preferred_element_type=jnp.float32))

    # seg[n, j] = sum of pt over the K-lane group containing lane j, i.e. the
    # original-row sum already broadcast across that row's lanes.
    seg = mxu(pt, ones_ref[...])
    # p_target normalization fused directly into the CDF-difference operand.
    # (seg is already lane-broadcast, so a single vector divide is the minimum.)
    diff = pe - pt / seg
    # Per-original-row cumulative sum via block-diagonal upper-triangular matmul:
    # cumsum distributes over subtraction, so one matmul handles both CDFs.
    cdf = mxu(diff, tri_ref[...])
    # Sublane-only reduction per step; cross-lane reduce + sqrt are deferred.
    acc_ref[...] += jnp.sum(cdf * cdf, axis=0, keepdims=True)

    @pl.when(j == pl.num_programs(1) - 1)
    def _finalize():
        row0 = jax.lax.broadcasted_iota(jnp.int32, out_ref.shape, 0) == 0
        acc_b = jnp.broadcast_to(acc_ref[...], out_ref.shape)
        out_ref[...] = jnp.where(row0, acc_b, 0.0)


def edm_loss_train(p_target: jax.Array, p_estimate: jax.Array) -> jax.Array:
    assert p_target.shape == p_estimate.shape and p_target.ndim == 2
    n, k = p_target.shape

    # ---- lane-packing geometry --------------------------------------------
    g = max(1, 128 // k)            # original rows packed per 128-lane group
    gk = g * k                      # packed lane width (<= 128 when k <= 128)
    npack = _cdiv(n, g)             # packed rows needed for the real data

    # ---- tile / grid selection (VMEM-budgeted, safe on v7x's smaller VMEM) --
    vmem_budget = 8 * 1024 * 1024                       # 2 inputs x 2 buffers
    lane_bytes = _round_up(gk, 128) * 4                 # f32 tile row in VMEM
    tile_cap = max(8, (vmem_budget // (4 * lane_bytes)) // 8 * 8)
    max_tile = min(1024, tile_cap)

    nsplit = 2 if npack >= 16 else 1                    # 2 TCs on v7x; no-op elsewhere
    per_split = _cdiv(npack, nsplit)
    steps = _cdiv(per_split, max_tile)
    tile = min(max_tile, _round_up(_cdiv(per_split, steps), 8))
    npack_pad = nsplit * steps * tile
    n_pad = npack_pad * g

    # ---- pad with uniform rows that contribute exactly zero to the loss -----
    if n_pad != n:
        fill = jnp.full((n_pad - n, k), 1.0 / k)
        p_target = jnp.concatenate([p_target, fill.astype(p_target.dtype)], axis=0)
        p_estimate = jnp.concatenate([p_estimate, fill.astype(p_estimate.dtype)], axis=0)

    pt_packed = p_target.reshape(npack_pad, gk)     # free, contiguous view
    pe_packed = p_estimate.reshape(npack_pad, gk)

    # ---- block-diagonal operands (built once, DMA'd once, kept resident) ----
    idx = jnp.arange(gk)
    same_group = (idx[:, None] // k) == (idx[None, :] // k)
    tri = (same_group & (idx[:, None] <= idx[None, :])).astype(jnp.bfloat16)
    ones_blk = same_group.astype(jnp.bfloat16)
    # TODO(synk): for very large num_classes (K >~ 2048) the (K, K) operands stop
    # fitting comfortably in VMEM and the cumsum would need tiling over K too.

    partial = pl.pallas_call(
        _edm_loss_kernel,
        out_shape=jax.ShapeDtypeStruct((nsplit * 8, gk), jnp.float32),
        grid=(nsplit, steps),
        in_specs=[
            pl.BlockSpec((gk, gk), lambda s, j: (0, 0)),          # ones (resident)
            pl.BlockSpec((gk, gk), lambda s, j: (0, 0)),          # tri  (resident)
            pl.BlockSpec((tile, gk), lambda s, j: (s * steps + j, 0)),
            pl.BlockSpec((tile, gk), lambda s, j: (s * steps + j, 0)),
        ],
        out_specs=pl.BlockSpec((8, gk), lambda s, j: (s, 0)),
        scratch_shapes=[pltpu.VMEM((1, gk), jnp.float32)],
        compiler_params=pltpu.CompilerParams(
            dimension_semantics=("parallel", "arbitrary"),
        ),
    )(ones_blk, tri, pt_packed, pe_packed)

    # Final cross-lane/partial reduce + sqrt on the tiny (nsplit*8, gk) partials.
    return jnp.sqrt(jnp.sum(partial) * (1.0 / float(n * k)))


def edm_loss_ref(p_target, p_estimate):
    """Pure-JAX reference mirroring the PyTorch forward."""
    pt = p_target.astype(jnp.float32)
    pt = pt / jnp.sum(pt, axis=1, keepdims=True)
    cdf_t = jnp.cumsum(pt, axis=1)
    cdf_e = jnp.cumsum(p_estimate.astype(jnp.float32), axis=1)
    diff = cdf_e - cdf_t
    return jnp.sqrt(jnp.mean(jnp.abs(diff) ** 2))


if __name__ == "__main__":
    num_classes = 10
    batch = 8

    key = jax.random.PRNGKey(0)
    k1, k2 = jax.random.split(key)
    # Positive "histogram"-like inputs (raw counts target, softmax estimate).
    p_target = jax.random.uniform(k1, (batch, num_classes), dtype=jnp.float32) + 0.1
    logits = jax.random.normal(k2, (batch, num_classes), dtype=jnp.float32)
    p_estimate = jax.nn.softmax(logits, axis=1)

    loss = jax.block_until_ready(edm_loss_train(p_target, p_estimate))

    ref = edm_loss_ref(p_target, p_estimate)
    assert jnp.allclose(loss, ref, atol=1e-5, rtol=1e-5), (loss, ref)

    print("KERNEL_OK")
</pallas_src>

<mosaic_0001>
module attributes {stable_mosaic.version = 11 : i64} {
  func.func @_edm_loss_kernel(%arg0: i32, %arg1: i32, %arg2: memref<120x120xbf16, #tpu.memory_space<vmem>>, %arg3: memref<120x120xbf16, #tpu.memory_space<vmem>>, %arg4: memref<8x120xf32, #tpu.memory_space<vmem>>, %arg5: memref<8x120xf32, #tpu.memory_space<vmem>>, %arg6: memref<8x120xf32, #tpu.memory_space<vmem>>, %arg7: memref<1x120xf32, #tpu.memory_space<vmem>>) attributes {dimension_semantics = [#tpu.dimension_semantics<parallel>, #tpu.dimension_semantics<arbitrary>], iteration_bounds = array<i64: 1, 1>, scalar_prefetch = 0 : i64, scratch_operands = 1 : i64, tpu.core_type = #tpu.core_type<tc>, window_params = [{pipeline_mode = #tpu.pipeline_mode<synchronous>, transform_indices = @transform_0, window_bounds = array<i64: 120, 120>}, {pipeline_mode = #tpu.pipeline_mode<synchronous>, transform_indices = @transform_1, window_bounds = array<i64: 120, 120>}, {transform_indices = @transform_2, window_bounds = array<i64: 8, 120>}, {transform_indices = @transform_3, window_bounds = array<i64: 8, 120>}, {transform_indices = @transform_4, window_bounds = array<i64: 8, 120>}]} {
    %c0_i32 = arith.constant 0 : i32
    %0 = arith.cmpi eq, %arg1, %c0_i32 : i32
    %1 = arith.extui %0 : i1 to i32
    %c0_i32_0 = arith.constant 0 : i32
    %2 = arith.cmpi ne, %1, %c0_i32_0 : i32
    scf.if %2 {
      %cst_18 = arith.constant 0.000000e+00 : f32
      %32 = vector.broadcast %cst_18 : f32 to vector<1x120xf32>
      %c0_19 = arith.constant 0 : index
      %c0_20 = arith.constant 0 : index
      %33 = vector.load %arg7[%c0_19, %c0_20] : memref<1x120xf32, #tpu.memory_space<vmem>>, vector<1x120xf32>
      tpu.vector_store %arg7[%c0_19, %c0_20], %32 {strides = array<i32>} : memref<1x120xf32, #tpu.memory_space<vmem>>, vector<1x120xf32>,
    } else {
    }
    %c0 = arith.constant 0 : index
    %c0_1 = arith.constant 0 : index
    %3 = vector.load %arg4[%c0, %c0_1] : memref<8x120xf32, #tpu.memory_space<vmem>>, vector<8x120xf32>
    %c0_2 = arith.constant 0 : index
    %c0_3 = arith.constant 0 : index
    %4 = vector.load %arg5[%c0_2, %c0_3] : memref<8x120xf32, #tpu.memory_space<vmem>>, vector<8x120xf32>
    %c0_4 = arith.constant 0 : index
    %c0_5 = arith.constant 0 : index
    %5 = vector.load %arg2[%c0_4, %c0_5] : memref<120x120xbf16, #tpu.memory_space<vmem>>, vector<120x120xbf16>
    %6 = arith.truncf %3 : vector<8x120xf32> to vector<8x120xbf16>
    %7 = arith.extf %6 : vector<8x120xbf16> to vector<8x120xf32>
    %8 = arith.subf %3, %7 : vector<8x120xf32>
    %9 = arith.truncf %8 : vector<8x120xf32> to vector<8x120xbf16>
    %cst = arith.constant dense<0.000000e+00> : vector<8x120xf32>
    %10 = tpu.matmul %6, %5, %cst {dimension_numbers = #tpu.dot_dimension_numbers<[1], [0], [0], [1], [0, 0, 1, 1], [], []>} : vector<8x120xbf16>, vector<120x120xbf16>, vector<8x120xf32> -> vector<8x120xf32>
    %cst_6 = arith.constant dense<0.000000e+00> : vector<8x120xf32>
    %11 = tpu.matmul %9, %5, %cst_6 {dimension_numbers = #tpu.dot_dimension_numbers<[1], [0], [0], [1], [0, 0, 1, 1], [], []>} : vector<8x120xbf16>, vector<120x120xbf16>, vector<8x120xf32> -> vector<8x120xf32>
    %12 = arith.addf %10, %11 : vector<8x120xf32>
    %13 = arith.divf %3, %12 : vector<8x120xf32>
    %14 = arith.subf %4, %13 : vector<8x120xf32>
    %c0_7 = arith.constant 0 : index
    %c0_8 = arith.constant 0 : index
    %15 = vector.load %arg3[%c0_7, %c0_8] : memref<120x120xbf16, #tpu.memory_space<vmem>>, vector<120x120xbf16>
    %16 = arith.truncf %14 : vector<8x120xf32> to vector<8x120xbf16>
    %17 = arith.extf %16 : vector<8x120xbf16> to vector<8x120xf32>
    %18 = arith.subf %14, %17 : vector<8x120xf32>
    %19 = arith.truncf %18 : vector<8x120xf32> to vector<8x120xbf16>
    %cst_9 = arith.constant dense<0.000000e+00> : vector<8x120xf32>
    %20 = tpu.matmul %16, %15, %cst_9 {dimension_numbers = #tpu.dot_dimension_numbers<[1], [0], [0], [1], [0, 0, 1, 1], [], []>} : vector<8x120xbf16>, vector<120x120xbf16>, vector<8x120xf32> -> vector<8x120xf32>
    %cst_10 = arith.constant dense<0.000000e+00> : vector<8x120xf32>
    %21 = tpu.matmul %19, %15, %cst_10 {dimension_numbers = #tpu.dot_dimension_numbers<[1], [0], [0], [1], [0, 0, 1, 1], [], []>} : vector<8x120xbf16>, vector<120x120xbf16>, vector<8x120xf32> -> vector<8x120xf32>
    %22 = arith.addf %20, %21 : vector<8x120xf32>
    %c0_11 = arith.constant 0 : index
    %c0_12 = arith.constant 0 : index
    %23 = vector.load %arg7[%c0_11, %c0_12] : memref<1x120xf32, #tpu.memory_space<vmem>>, vector<1x120xf32>
    %24 = arith.mulf %22, %22 : vector<8x120xf32>
    %cst_13 = arith.constant dense<0.000000e+00> : vector<120xf32>
    %25 = vector.multi_reduction <add>, %24, %cst_13 [0] : vector<8x120xf32> to vector<120xf32>
    %26 = vector.shape_cast %25 : vector<120xf32> to vector<1x120xf32>
    %27 = arith.addf %23, %26 : vector<1x120xf32>
    %c0_14 = arith.constant 0 : index
    %c0_15 = arith.constant 0 : index
    %28 = vector.load %arg7[%c0_14, %c0_15] : memref<1x120xf32, #tpu.memory_space<vmem>>, vector<1x120xf32>
    tpu.vector_store %arg7[%c0_14, %c0_15], %27 {strides = array<i32>} : memref<1x120xf32, #tpu.memory_space<vmem>>, vector<1x120xf32>,
    %c0_i32_16 = arith.constant 0 : i32
    %29 = arith.cmpi eq, %arg1, %c0_i32_16 : i32
    %30 = arith.extui %29 : i1 to i32
    %c0_i32_17 = arith.constant 0 : i32
    %31 = arith.cmpi ne, %30, %c0_i32_17 : i32
    scf.if %31 {
      %32 = tpu.iota {dimensions = array<i32: 0>} : vector<8x120xi32>
      %c0_i32_18 = arith.constant 0 : i32
      %33 = vector.broadcast %c0_i32_18 : i32 to vector<8x120xi32>
      %34 = arith.cmpi eq, %32, %33 : vector<8x120xi32>
      %c0_19 = arith.constant 0 : index
      %c0_20 = arith.constant 0 : index
      %35 = vector.load %arg7[%c0_19, %c0_20] : memref<1x120xf32, #tpu.memory_space<vmem>>, vector<1x120xf32>
      %36 = vector.shape_cast %35 : vector<1x120xf32> to vector<1x120xf32>
      %37 = vector.broadcast %36 : vector<1x120xf32> to vector<8x120xf32>
      %cst_21 = arith.constant 0.000000e+00 : f32
      %38 = vector.broadcast %cst_21 : f32 to vector<8x120xf32>
      %39 = arith.select %34, %37, %38 : vector<8x120xi1>, vector<8x120xf32>
      %c0_22 = arith.constant 0 : index
      %c0_23 = arith.constant 0 : index
      %40 = vector.load %arg6[%c0_22, %c0_23] : memref<8x120xf32, #tpu.memory_space<vmem>>, vector<8x120xf32>
      tpu.vector_store %arg6[%c0_22, %c0_23], %39 {strides = array<i32>} : memref<8x120xf32, #tpu.memory_space<vmem>>, vector<8x120xf32>,
    } else {
    }
    return
  }
  func.func @transform_0(%arg0: i32, %arg1: i32) -> (i32, i32) {
    %c0_i32 = arith.constant 0 : i32
    %c0_i32_0 = arith.constant 0 : i32
    %c0_i32_1 = arith.constant 0 : i32
    return %c0_i32, %c0_i32_0 : i32, i32
  }
  func.func @transform_1(%arg0: i32, %arg1: i32) -> (i32, i32) {
    %c0_i32 = arith.constant 0 : i32
    %c0_i32_0 = arith.constant 0 : i32
    %c0_i32_1 = arith.constant 0 : i32
    return %c0_i32, %c0_i32_0 : i32, i32
  }
  func.func @transform_2(%arg0: i32, %arg1: i32) -> (i32, i32) {
    %c1_i32 = arith.constant 1 : i32
    %0 = arith.muli %arg0, %c1_i32 : i32
    %1 = arith.addi %0, %arg1 : i32
    %c0_i32 = arith.constant 0 : i32
    %c0_i32_0 = arith.constant 0 : i32
    return %1, %c0_i32 : i32, i32
  }
  func.func @transform_3(%arg0: i32, %arg1: i32) -> (i32, i32) {
    %c1_i32 = arith.constant 1 : i32
    %0 = arith.muli %arg0, %c1_i32 : i32
    %1 = arith.addi %0, %arg1 : i32
    %c0_i32 = arith.constant 0 : i32
    %c0_i32_0 = arith.constant 0 : i32
    return %1, %c0_i32 : i32, i32
  }
  func.func @transform_4(%arg0: i32, %arg1: i32) -> (i32, i32) {
    %c0_i32 = arith.constant 0 : i32
    %c0_i32_0 = arith.constant 0 : i32
    return %arg0, %c0_i32 : i32, i32
  }
}

</mosaic_0001>

<llo_original>
// kernel: tpu_custom_call.1
$region0: #{tpu_custom_call.1}
  #allocation0 [shape = 'u32[]', space=smem, size = 0x4, offset = 0x4, fixed_abs, tag = 'smem constant byte address 0x4 - core index']
  #allocation1 [shape = 'u32[144,128]{1,0:T(1,128)}', space=vmem, size = 0x12000, scoped, tag = 'internal scratch']
  #allocation2 [shape = 'f32[1,120]{1,0:T(1,128)}', space=vmem, size = 0x200, scoped, tag = 'scratch operand']
  %s0 = inlined_call_operand.hbm [shape: bf16[120,120], index: 0, kind: input, shape index: {}]
  %s1 = inlined_call_operand.hbm [shape: bf16[120,120], index: 1, kind: input, shape index: {}]
  %s2 = inlined_call_operand.hbm [shape: f32[8,120], index: 2, kind: input, shape index: {}]
  %s3 = inlined_call_operand.hbm [shape: f32[8,120], index: 3, kind: input, shape index: {}]
  %s4 = inlined_call_operand.hbm [shape: f32[8,120], index: 4, kind: output, shape index: {}]
  %s5 = sld [smem:[#allocation0]]
  $region50: #{tpu_custom_call.1} parent=0
    _
  %s7 = ssub.s32 1, %s5
  %s8 = scalar_select 0, %s7, %s5
  $region1: #{tpu_custom_call.1} parent=0
    #allocation3 [shape = 'u8[30720]{0}', space=vmem, size = 0x7800, scoped, tag = 'input window, operand 0, single buffered']
    #allocation4 [shape = 's32[1]{0}', space=sflag, size = 0x4, scoped, tag = 'scoped memory for tpu_custom_call.1']
    #allocation5 [shape = 's32[1]{0}', space=sflag, size = 0x4, scoped, tag = 'scoped memory for tpu_custom_call.1']
    #allocation6 [shape = 'u8[30720]{0}', space=vmem, size = 0x7800, scoped, tag = 'input window, operand 1, single buffered']
    #allocation7 [shape = 's32[1]{0}', space=sflag, size = 0x4, scoped, tag = 'scoped memory for tpu_custom_call.1']
    #allocation8 [shape = 'u8[4096]{0}', space=vmem, size = 0x1000, scoped, tag = 'input window, operand 2, single buffered']
    #allocation9 [shape = 'u8[4096]{0}', space=vmem, size = 0x1000, scoped, tag = 'input window, operand 3, single buffered']
    #allocation10 [shape = 's32[1]{0}', space=sflag, size = 0x4, scoped, tag = 'scoped memory for tpu_custom_call.1']
    #allocation11 [shape = 'u8[4096]{0}', space=vmem, size = 0x1000, scoped, tag = 'output window, operand 0, single buffered']
    %9 = vsyncpa [#allocation4], 0
    %10 = vsyncpa [#allocation7], 0
    %11 = vsyncpa [#allocation10], 0
    %12 = vsyncpa [#allocation5], 0
    // Predicated region
    $region2: #{tpu_custom_call.1} parent=1 // pred_check
      _
    $region3: #{tpu_custom_call.1} parent=1 // pred_check_branch
      %14 = sbr.rel (0) target = $region5
    $region4: #{tpu_custom_call.1} parent=1 // pred_region
      %s16 = ssub.s32 960, 960
      %17 = vsyncadd [#allocation4], %s16
      %s18 = sshll.u32 [#allocation3], 4
      %s19 = int_to_ptr.vmem [resolvable:$true] %s18
      %24 = dma.hbm_to_vmem [thread:$0]  %s0, 960, %s19, [#allocation4], 64, 64, 4
    $region5: #{tpu_custom_call.1} parent=1 // pred_fallthru
      _
    // Predicated region
    $region6: #{tpu_custom_call.1} parent=1 // pred_check
      _
    $region7: #{tpu_custom_call.1} parent=1 // pred_check_branch
      %26 = sbr.rel (0) target = $region9
    $region8: #{tpu_custom_call.1} parent=1 // pred_region
      %s28 = ssub.s32 960, 960
      %29 = vsyncadd [#allocation7], %s28
      %s30 = sshll.u32 [#allocation6], 4
      %s31 = int_to_ptr.vmem [resolvable:$true] %s30
      %36 = dma.hbm_to_vmem [thread:$0]  %s1, 960, %s31, [#allocation7], 64, 64, 4
    $region9: #{tpu_custom_call.1} parent=1 // pred_fallthru
      _
    // Predicated region
    $region10: #{tpu_custom_call.1} parent=1 // pred_check
      _
    $region11: #{tpu_custom_call.1} parent=1 // pred_check_branch
      %38 = sbr.rel (0) target = $region13
    $region12: #{tpu_custom_call.1} parent=1 // pred_region
      %s39 = sadd.s32 0, 0
      %s41 = ssub.s32 128, 128
      %42 = vsyncadd [#allocation7], %s41
      %s43 = smul.addr %s39, 128
      %s44 = scalar_lea.hbm %s2, %s43
      %s46 = sshll.u32 [#allocation8], 4
      %s47 = int_to_ptr.vmem [resolvable:$true] %s46
      %49 = dma.hbm_to_vmem [thread:$0]  %s44, 128, %s47, [#allocation7]
    $region13: #{tpu_custom_call.1} parent=1 // pred_fallthru
      _
    // Predicated region
    $region14: #{tpu_custom_call.1} parent=1 // pred_check
      _
    $region15: #{tpu_custom_call.1} parent=1 // pred_check_branch
      %51 = sbr.rel (0) target = $region17
    $region16: #{tpu_custom_call.1} parent=1 // pred_region
      %s52 = sadd.s32 0, 0
      %s54 = ssub.s32 128, 128
      %55 = vsyncadd [#allocation10], %s54
      %s56 = smul.addr %s52, 128
      %s57 = scalar_lea.hbm %s3, %s56
      %s59 = sshll.u32 [#allocation9], 4
      %s60 = int_to_ptr.vmem [resolvable:$true] %s59
      %62 = dma.hbm_to_vmem [thread:$0]  %s57, 128, %s60, [#allocation10]
    $region17: #{tpu_custom_call.1} parent=1 // pred_fallthru
      _
    // Predicated region
    $region18: #{tpu_custom_call.1} parent=1 // pred_check
      _
    $region19: #{tpu_custom_call.1} parent=1 // pred_check_branch
      %64 = sbr.rel (0) target = $region21
    $region20: #{tpu_custom_call.1} parent=1 // pred_region
      %65 = dma.done [#allocation4], 960
    $region21: #{tpu_custom_call.1} parent=1 // pred_fallthru
      _
    // Predicated region
    $region22: #{tpu_custom_call.1} parent=1 // pred_check
      _
    $region23: #{tpu_custom_call.1} parent=1 // pred_check_branch
      %67 = sbr.rel (0) target = $region25
    $region24: #{tpu_custom_call.1} parent=1 // pred_region
      %68 = dma.done [#allocation7], 960
    $region25: #{tpu_custom_call.1} parent=1 // pred_fallthru
      _
    // Predicated region
    $region26: #{tpu_custom_call.1} parent=1 // pred_check
      _
    $region27: #{tpu_custom_call.1} parent=1 // pred_check_branch
      %70 = sbr.rel (0) target = $region29
    $region28: #{tpu_custom_call.1} parent=1 // pred_region
      %71 = dma.done [#allocation7], 128
    $region29: #{tpu_custom_call.1} parent=1 // pred_fallthru
      _
    // Predicated region
    $region30: #{tpu_custom_call.1} parent=1 // pred_check
      _
    $region31: #{tpu_custom_call.1} parent=1 // pred_check_branch
      %73 = sbr.rel (0) target = $region33
    $region32: #{tpu_custom_call.1} parent=1 // pred_region
      %74 = dma.done [#allocation10], 128
    $region33: #{tpu_custom_call.1} parent=1 // pred_fallthru
      _
    %s75 = sadd.s32 0, 0
    %s76 = sadd.s32 0, 0
    %p78 = scmp.eq.s32.totalorder 0, 0
    // Predicated region
    $region34: #{tpu_custom_call.1} parent=1 // pred_check
      %p79 = pneg %p78
    $region35: #{tpu_custom_call.1} parent=1 // pred_check_branch
      %81 = sbr.rel (%p79) target = $region37
    $region36: #{tpu_custom_call.1} parent=1 // pred_region
      %vm82 = vcmask 974848
      %83 = vst.msk [vmem:[#allocation2] sm:$0x1] %vm82, 0.0
    $region37: #{tpu_custom_call.1} parent=1 // pred_fallthru
      _
    %v84 = vld [vmem:[#allocation8] sm:$0xff]
    %v85 = vld [vmem:[#allocation9] sm:$0xff]
    %v86 = vld [vmem:[#allocation3] sm:$0xf]
    %v87 = vld [vmem:[#allocation3 + $0x4] sm:$0xf]
    %v88 = vld [vmem:[#allocation3 + $0x8] sm:$0xf]
    %v89 = vld [vmem:[#allocation3 + $0xc] sm:$0xf]
    %v90 = vld [vmem:[#allocation3 + $0x10] sm:$0xf]
    %v91 = vld [vmem:[#allocation3 + $0x14] sm:$0xf]
    %v92 = vld [vmem:[#allocation3 + $0x18] sm:$0xf]
    %v93 = vld [vmem:[#allocation3 + $0x1c] sm:$0xf]
    %v94 = vld [vmem:[#allocation3 + $0x20] sm:$0xf]
    %v95 = vld [vmem:[#allocation3 + $0x24] sm:$0xf]
    %v96 = vld [vmem:[#allocation3 + $0x28] sm:$0xf]
    %v97 = vld [vmem:[#allocation3 + $0x2c] sm:$0xf]
    %v98 = vld [vmem:[#allocation3 + $0x30] sm:$0xf]
    %v99 = vld [vmem:[#allocation3 + $0x34] sm:$0xf]
    %v100 = vld [vmem:[#allocation3 + $0x38] sm:$0xf]
    %v101 = vpack.c.bf16 %v84, %v84
    %v102 = vunpack.c.l.bf16 %v101
    %v103 = vsub.f32 %v84, %v102
    %v104 = vpack.c.bf16 %v103, %v103
    %v120 = vunpack.c.l.b16 %v86
    %v121 = vunpack.c.l.b16 %v87
    %v122 = vunpack.c.l.b16 %v88
    %v123 = vunpack.c.l.b16 %v89
    %v124 = vunpack.c.l.b16 %v90
    %v125 = vunpack.c.l.b16 %v91
    %v126 = vunpack.c.l.b16 %v92
    %v127 = vunpack.c.l.b16 %v93
    %v128 = vunpack.c.l.b16 %v94
    %v129 = vunpack.c.l.b16 %v95
    %v130 = vunpack.c.l.b16 %v96
    %v131 = vunpack.c.l.b16 %v97
    %v132 = vunpack.c.l.b16 %v98
    %v133 = vunpack.c.l.b16 %v99
    %v134 = vunpack.c.l.b16 %v100
    %v135 = vpack.c.b16 %v121, %v120
    %v136 = vpack.c.b16 %v123, %v122
    %v137 = vpack.c.b16 %v125, %v124
    %v138 = vpack.c.b16 %v127, %v126
    %v139 = vpack.c.b16 %v129, %v128
    %v140 = vpack.c.b16 %v131, %v130
    %v141 = vpack.c.b16 %v133, %v132
    %v142 = vpack.c.b16 %v134, %v134
    %vm150 = vcmask 982016
    %v152 = vsel %vm150, %v104, 0
    %vm154 = vcmask 1043456
    %v156 = vsel %vm154, %v142, 0
    %158 = vmatprep.subr.bf16.mxu0 0
    %159 = vmatpush1.bf16.msra.mxu0 %v156
    %160 = vmatprep.subr.bf16.mxu0 0
    %161 = vmatpush1.bf16.msra.mxu0 %v141
    %162 = vmatprep.subr.bf16.mxu0 0
    %163 = vmatpush1.bf16.msra.mxu0 %v140
    %164 = vmatprep.subr.bf16.mxu0 0
    %165 = vmatpush1.bf16.msra.mxu0 %v139
    %166 = vmatprep.subr.bf16.mxu0 0
    %167 = vmatpush1.bf16.msra.mxu0 %v138
    %168 = vmatprep.subr.bf16.mxu0 0
    %169 = vmatpush1.bf16.msra.mxu0 %v137
    %170 = vmatprep.subr.bf16.mxu0 0
    %171 = vmatpush1.bf16.msra.mxu0 %v136
    %172 = vmatprep.subr.bf16.mxu0 0
    %173 = vmatpush1.bf16.msra.mxu0 %v135
    %174 = vmatprep.subr.bf16.mxu0 0
    %175 = vmatpush2.bf16.msra.mxu0 0
    %176 = vmatprep.subr.bf16.mxu0 0
    %177 = vmatpush2.bf16.msra.mxu0 0
    %178 = vmatprep.subr.bf16.mxu0 0
    %179 = vmatpush2.bf16.msra.mxu0 0
    %180 = vmatprep.subr.bf16.mxu0 0
    %181 = vmatpush2.bf16.msra.mxu0 0
    %182 = vmatprep.subr.bf16.mxu0 0
    %183 = vmatpush2.bf16.msra.mxu0 0
    %184 = vmatprep.subr.bf16.mxu0 0
    %185 = vmatpush2.bf16.msra.mxu0 0
    %186 = vmatprep.subr.bf16.mxu0 0
    %187 = vmatpush2.bf16.msra.mxu0 0
    %188 = vmatprep.subr.bf16.mxu0 0
    %189 = vmatpush2.bf16.msra.mxu0 0
    %190 = vmatprep.mubr.bf16.mxu0 0
    %191 = vmatmul.mubr.bf16.gmra.mxu0 %v152
    %v192 = vpop.f32.mrf.mxu0
    %v193 = vadd.f32 0.0, %v192
    %v194 = vpop.f32.mrf.mxu0
    %v195 = vpop.f32.mrf.mxu0
    %v196 = vpop.f32.mrf.mxu0
    %197 = vdwg.mxu0
    %v199 = vsel %vm150, %v101, 0
    %201 = vmatprep.subr.bf16.mxu0 0
    %202 = vmatpush1.bf16.msra.mxu0 %v156
    %203 = vmatprep.subr.bf16.mxu0 0
    %204 = vmatpush1.bf16.msra.mxu0 %v141
    %205 = vmatprep.subr.bf16.mxu0 0
    %206 = vmatpush1.bf16.msra.mxu0 %v140
    %207 = vmatprep.subr.bf16.mxu0 0
    %208 = vmatpush1.bf16.msra.mxu0 %v139
    %209 = vmatprep.subr.bf16.mxu0 0
    %210 = vmatpush1.bf16.msra.mxu0 %v138
    %211 = vmatprep.subr.bf16.mxu0 0
    %212 = vmatpush1.bf16.msra.mxu0 %v137
    %213 = vmatprep.subr.bf16.mxu0 0
    %214 = vmatpush1.bf16.msra.mxu0 %v136
    %215 = vmatprep.subr.bf16.mxu0 0
    %216 = vmatpush1.bf16.msra.mxu0 %v135
    %217 = vmatprep.subr.bf16.mxu0 0
    %218 = vmatpush2.bf16.msra.mxu0 0
    %219 = vmatprep.subr.bf16.mxu0 0
    %220 = vmatpush2.bf16.msra.mxu0 0
    %221 = vmatprep.subr.bf16.mxu0 0
    %222 = vmatpush2.bf16.msra.mxu0 0
    %223 = vmatprep.subr.bf16.mxu0 0
    %224 = vmatpush2.bf16.msra.mxu0 0
    %225 = vmatprep.subr.bf16.mxu0 0
    %226 = vmatpush2.bf16.msra.mxu0 0
    %227 = vmatprep.subr.bf16.mxu0 0
    %228 = vmatpush2.bf16.msra.mxu0 0
    %229 = vmatprep.subr.bf16.mxu0 0
    %230 = vmatpush2.bf16.msra.mxu0 0
    %231 = vmatprep.subr.bf16.mxu0 0
    %232 = vmatpush2.bf16.msra.mxu0 0
    %233 = vmatprep.mubr.bf16.mxu0 0
    %234 = vmatmul.mubr.bf16.gmra.mxu0 %v199
    %v235 = vpop.f32.mrf.mxu0
    %v236 = vadd.f32 %v193, %v235
    %v237 = vpop.f32.mrf.mxu0
    %v238 = vpop.f32.mrf.mxu0
    %v239 = vpop.f32.mrf.mxu0
    %240 = vdwg.mxu0
    %v241 = vrcp.pop %v236
    %v242 = vmul.f32 %v84, %v241
    %v243 = vsub.f32 %v85, %v242
    %v244 = vld [vmem:[#allocation6] sm:$0xf]
    %v245 = vld [vmem:[#allocation6 + $0x4] sm:$0xf]
    %v246 = vld [vmem:[#allocation6 + $0x8] sm:$0xf]
    %v247 = vld [vmem:[#allocation6 + $0xc] sm:$0xf]
    %v248 = vld [vmem:[#allocation6 + $0x10] sm:$0xf]
    %v249 = vld [vmem:[#allocation6 + $0x14] sm:$0xf]
    %v250 = vld [vmem:[#allocation6 + $0x18] sm:$0xf]
    %v251 = vld [vmem:[#allocation6 + $0x1c] sm:$0xf]
    %v252 = vld [vmem:[#allocation6 + $0x20] sm:$0xf]
    %v253 = vld [vmem:[#allocation6 + $0x24] sm:$0xf]
    %v254 = vld [vmem:[#allocation6 + $0x28] sm:$0xf]
    %v255 = vld [vmem:[#allocation6 + $0x2c] sm:$0xf]
    %v256 = vld [vmem:[#allocation6 + $0x30] sm:$0xf]
    %v257 = vld [vmem:[#allocation6 + $0x34] sm:$0xf]
    %v258 = vld [vmem:[#allocation6 + $0x38] sm:$0xf]
    %v259 = vpack.c.bf16 %v243, %v243
    %v260 = vunpack.c.l.bf16 %v259
    %v261 = vsub.f32 %v243, %v260
    %v262 = vpack.c.bf16 %v261, %v261
    %v278 = vunpack.c.l.b16 %v244
    %v279 = vunpack.c.l.b16 %v245
    %v280 = vunpack.c.l.b16 %v246
    %v281 = vunpack.c.l.b16 %v247
    %v282 = vunpack.c.l.b16 %v248
    %v283 = vunpack.c.l.b16 %v249
    %v284 = vunpack.c.l.b16 %v250
    %v285 = vunpack.c.l.b16 %v251
    %v286 = vunpack.c.l.b16 %v252
    %v287 = vunpack.c.l.b16 %v253
    %v288 = vunpack.c.l.b16 %v254
    %v289 = vunpack.c.l.b16 %v255
    %v290 = vunpack.c.l.b16 %v256
    %v291 = vunpack.c.l.b16 %v257
    %v292 = vunpack.c.l.b16 %v258
    %v293 = vpack.c.b16 %v279, %v278
    %v294 = vpack.c.b16 %v281, %v280
    %v295 = vpack.c.b16 %v283, %v282
    %v296 = vpack.c.b16 %v285, %v284
    %v297 = vpack.c.b16 %v287, %v286
    %v298 = vpack.c.b16 %v289, %v288
    %v299 = vpack.c.b16 %v291, %v290
    %v300 = vpack.c.b16 %v292, %v292
    %v309 = vsel %vm150, %v262, 0
    %v312 = vsel %vm154, %v300, 0
    %314 = vmatprep.subr.bf16.mxu0 0
    %315 = vmatpush1.bf16.msra.mxu0 %v312
    %316 = vmatprep.subr.bf16.mxu0 0
    %317 = vmatpush1.bf16.msra.mxu0 %v299
    %318 = vmatprep.subr.bf16.mxu0 0
    %319 = vmatpush1.bf16.msra.mxu0 %v298
    %320 = vmatprep.subr.bf16.mxu0 0
    %321 = vmatpush1.bf16.msra.mxu0 %v297
    %322 = vmatprep.subr.bf16.mxu0 0
    %323 = vmatpush1.bf16.msra.mxu0 %v296
    %324 = vmatprep.subr.bf16.mxu0 0
    %325 = vmatpush1.bf16.msra.mxu0 %v295
    %326 = vmatprep.subr.bf16.mxu0 0
    %327 = vmatpush1.bf16.msra.mxu0 %v294
    %328 = vmatprep.subr.bf16.mxu0 0
    %329 = vmatpush1.bf16.msra.mxu0 %v293
    %330 = vmatprep.subr.bf16.mxu0 0
    %331 = vmatpush2.bf16.msra.mxu0 0
    %332 = vmatprep.subr.bf16.mxu0 0
    %333 = vmatpush2.bf16.msra.mxu0 0
    %334 = vmatprep.subr.bf16.mxu0 0
    %335 = vmatpush2.bf16.msra.mxu0 0
    %336 = vmatprep.subr.bf16.mxu0 0
    %337 = vmatpush2.bf16.msra.mxu0 0
    %338 = vmatprep.subr.bf16.mxu0 0
    %339 = vmatpush2.bf16.msra.mxu0 0
    %340 = vmatprep.subr.bf16.mxu0 0
    %341 = vmatpush2.bf16.msra.mxu0 0
    %342 = vmatprep.subr.bf16.mxu0 0
    %343 = vmatpush2.bf16.msra.mxu0 0
    %344 = vmatprep.subr.bf16.mxu0 0
    %345 = vmatpush2.bf16.msra.mxu0 0
    %346 = vmatprep.mubr.bf16.mxu0 0
    %347 = vmatmul.mubr.bf16.gmra.mxu0 %v309
    %v348 = vpop.f32.mrf.mxu0
    %v349 = vadd.f32 0.0, %v348
    %v350 = vpop.f32.mrf.mxu0
    %v351 = vpop.f32.mrf.mxu0
    %v352 = vpop.f32.mrf.mxu0
    %353 = vdwg.mxu0
    %v355 = vsel %vm150, %v259, 0
    %357 = vmatprep.subr.bf16.mxu0 0
    %358 = vmatpush1.bf16.msra.mxu0 %v312
    %359 = vmatprep.subr.bf16.mxu0 0
    %360 = vmatpush1.bf16.msra.mxu0 %v299
    %361 = vmatprep.subr.bf16.mxu0 0
    %362 = vmatpush1.bf16.msra.mxu0 %v298
    %363 = vmatprep.subr.bf16.mxu0 0
    %364 = vmatpush1.bf16.msra.mxu0 %v297
    %365 = vmatprep.subr.bf16.mxu0 0
    %366 = vmatpush1.bf16.msra.mxu0 %v296
    %367 = vmatprep.subr.bf16.mxu0 0
    %368 = vmatpush1.bf16.msra.mxu0 %v295
    %369 = vmatprep.subr.bf16.mxu0 0
    %370 = vmatpush1.bf16.msra.mxu0 %v294
    %371 = vmatprep.subr.bf16.mxu0 0
    %372 = vmatpush1.bf16.msra.mxu0 %v293
    %373 = vmatprep.subr.bf16.mxu0 0
    %374 = vmatpush2.bf16.msra.mxu0 0
    %375 = vmatprep.subr.bf16.mxu0 0
    %376 = vmatpush2.bf16.msra.mxu0 0
    %377 = vmatprep.subr.bf16.mxu0 0
    %378 = vmatpush2.bf16.msra.mxu0 0
    %379 = vmatprep.subr.bf16.mxu0 0
    %380 = vmatpush2.bf16.msra.mxu0 0
    %381 = vmatprep.subr.bf16.mxu0 0
    %382 = vmatpush2.bf16.msra.mxu0 0
    %383 = vmatprep.subr.bf16.mxu0 0
    %384 = vmatpush2.bf16.msra.mxu0 0
    %385 = vmatprep.subr.bf16.mxu0 0
    %386 = vmatpush2.bf16.msra.mxu0 0
    %387 = vmatprep.subr.bf16.mxu0 0
    %388 = vmatpush2.bf16.msra.mxu0 0
    %389 = vmatprep.mubr.bf16.mxu0 0
    %390 = vmatmul.mubr.bf16.gmra.mxu0 %v355
    %v391 = vpop.f32.mrf.mxu0
    %v392 = vadd.f32 %v349, %v391
    %v393 = vpop.f32.mrf.mxu0
    %v394 = vpop.f32.mrf.mxu0
    %v395 = vpop.f32.mrf.mxu0
    %396 = vdwg.mxu0
    %v397 = vld [vmem:[#allocation2] sm:$0x1]
    %v398 = vmul.f32 %v392, %v392
    %v399 = vsel %vm150, %v398, 0.0
    %v400 = vrot.slane %v399, 4
    %v401 = vadd.f32 %v399, %v400
    %v402 = vrot.slane %v401, 2
    %v403 = vadd.f32 %v401, %v402
    %v404 = vrot.slane %v403, 1
    %v405 = vadd.f32 %v403, %v404
    %v406 = vadd.f32 %v397, %v405
    %vm407 = vcmask 974848
    %408 = vst.msk [vmem:[#allocation2] sm:$0x1] %vm407, %v406
    // Predicated region
    $region38: #{tpu_custom_call.1} parent=1 // pred_check
      %p409 = pneg %p78
    $region39: #{tpu_custom_call.1} parent=1 // pred_check_branch
      %411 = sbr.rel (%p409) target = $region41
    $region40: #{tpu_custom_call.1} parent=1 // pred_region
      %v412 = vlaneseq
      %v413 = vshrl.u32 %v412, 7
      %vm414 = vcmp.eq.s32.totalorder %v413, 0
      %v415 = vld [vmem:[#allocation2] sm:$0x1]
      %v417 = vlaneseq
      %v418 = vshrl.u32 %v417, 7
      %v419 = vsub.s32 0, %v418
      %v420 = vrot.slane %v415, %v419
      %v422 = vsel %vm414, %v420, 0.0
      %423 = vst.msk [vmem:[#allocation11] sm:$0xff] %vm150, %v422
    $region41: #{tpu_custom_call.1} parent=1 // pred_fallthru
      _
    // Predicated region
    $region42: #{tpu_custom_call.1} parent=1 // pred_check
      _
    $region43: #{tpu_custom_call.1} parent=1 // pred_check_branch
      %425 = sbr.rel (0) target = $region45
    $region44: #{tpu_custom_call.1} parent=1 // pred_region
      %s427 = ssub.s32 128, 128
      %428 = vsyncadd [#allocation5], %s427
      %s430 = sshll.u32 [#allocation11], 4
      %s431 = int_to_ptr.vmem [resolvable:$true] %s430
      %433 = dma.vmem_to_hbm [thread:$0]  %s431, 128, %s4, [#allocation5]
    $region45: #{tpu_custom_call.1} parent=1 // pred_fallthru
      _
    // Predicated region
    $region46: #{tpu_custom_call.1} parent=1 // pred_check
      _
    $region47: #{tpu_custom_call.1} parent=1 // pred_check_branch
      %435 = sbr.rel (0) target = $region49
    $region48: #{tpu_custom_call.1} parent=1 // pred_region
      %436 = dma.done [#allocation5], 128
    $region49: #{tpu_custom_call.1} parent=1 // pred_fallthru
      _
    %437 = vsyncpa [#allocation4], 1
    %438 = vsyncpa [#allocation7], 1
    %439 = vsyncpa [#allocation10], 1
    %440 = vsyncpa [#allocation5], 1

</llo_original>
